<compile_context>
chip_gen: v7x
topology: tpu7x:2x2x1
jax: 0.10.0
libtpu: 0.0.40
codegen_flags: <defaults>
</compile_context>

<pallas_src>
from typing import List, Tuple

import jax
import jax.numpy as jnp
from jax import lax
from jax.experimental import pallas as pl
from jax.experimental.pallas import tpu as pltpu


def _round_up(n: int, m: int) -> int:
    return ((n + m - 1) // m) * m


def _tanh_dtype():
    """bf16 tanh on v6e/v7x (bf16 EUP); f32 on v5e and older."""
    try:
        kind = jax.devices()[0].device_kind.lower()
    except Exception:
        kind = ""
    if any(v in kind for v in ("v2", "v3", "v4", "v5")):
        return jnp.float32
    return jnp.bfloat16


def _make_mlp_kernel(num_layers: int, tanh_dtype):
    """Fused transposed-MLP kernel.

    Ref order: (x_ref, W0T, b0, W1T, b1, ..., W_{L-1}T, b_{L-1}, out_ref)
      x_ref : (TB, num_inp)   f32   -- natural layout; cast to bf16 in-kernel
      WiT   : (out_i, in_i)   bf16  -- PyTorch weight layout (out, in)
      bi    : (out_i, 1)      f32   -- broadcasts across lanes (batch)
      out   : (num_out, TB)   bf16  -- lane-dense (batch on the 128-lane axis)

    Layer 0 contracts the feature axis of both operands (y0 = W0 @ x^T), which
    puts the batch on lanes without any wrapper-side transpose.  Trunk layers
    apply tanh; the head does not.
    """

    def kernel(*refs):
        x_ref = refs[0]
        out_ref = refs[-1]
        h = None
        for i in range(num_layers):
            w = refs[1 + 2 * i][...]                    # bf16 (out_i, in_i)
            b = refs[2 + 2 * i][...]                    # f32  (out_i, 1)
            if i == 0:
                x = x_ref[...].astype(jnp.bfloat16)     # (TB, in0)
                # Contract feature axis of both operands -> (out0, TB); the
                # implicit transpose rides the MXU/XLU slot (free here).
                y = lax.dot_general(
                    w, x, (((1,), (1,)), ((), ())),
                    preferred_element_type=jnp.float32)
            else:
                y = jnp.dot(w, h, preferred_element_type=jnp.float32)
            y = y + b                                    # f32 bias add
            if i < num_layers - 1:
                # bf16 tanh on v6e/v7x keeps the EUP off the critical path.
                h = jnp.tanh(y.astype(tanh_dtype)).astype(jnp.bfloat16)
            else:
                out_ref[...] = y.astype(out_ref.dtype)   # head: no activation

    return kernel


def mlp_forward(x: jax.Array,
                params: List[Tuple[jax.Array, jax.Array]],
                *,
                block_batch: int = 32768,
                transposed_output: bool = False) -> jax.Array:
    """MLPNet.forward: logits = head(trunk(x)), one fused Pallas call.

    x: (batch, num_inp) float32 (natural layout; no wrapper transpose/cast).
    params: list of (W, b) with W shape (in, out), b shape (out,); last entry
            is the head, all previous entries are trunk layers (tanh applied).
    """
    batch, num_inp = x.shape
    num_out = params[-1][0].shape[1]
    num_layers = len(params)

    # --- batch tile selection -------------------------------------------
    # Lane axis must be a multiple of 128; default tile is large so per-step
    # overhead (~0.35 us) is <<  the DMA time of the tile.
    tb_cap = max(128, (block_batch // 128) * 128)
    padded128 = _round_up(batch, 128)
    tb = min(tb_cap, padded128)
    # Ensure >= 2 grid steps when possible so the "parallel" batch axis
    # shards across both TensorCores on v7x.
    if padded128 > 128 and _round_up(batch, tb) // tb < 2:
        tb = _round_up(pl.cdiv(padded128, 2), 128)
    padded = _round_up(batch, tb)
    grid = (padded // tb,)

    # Natural-layout input; pad batch only if needed (padded rows produce
    # garbage logits that are sliced off below -- do not remove the slice).
    x_p = x if padded == batch else jnp.pad(x, ((0, padded - batch), (0, 0)))

    args = [x_p]
    in_specs = [pl.BlockSpec((tb, num_inp), lambda i: (i, 0))]
    flops = 0
    transcendentals = 0
    param_bytes = 0
    for li, (w, b) in enumerate(params):
        w_t = jnp.asarray(w).T.astype(jnp.bfloat16)               # (out, in)
        b2 = jnp.asarray(b).reshape(-1, 1).astype(jnp.float32)    # (out, 1)
        args.append(w_t)
        in_specs.append(pl.BlockSpec(w_t.shape, lambda i: (0, 0)))
        args.append(b2)
        in_specs.append(pl.BlockSpec(b2.shape, lambda i: (0, 0)))
        fan_in, fan_out = w.shape
        flops += 2 * padded * fan_in * fan_out
        if li < num_layers - 1:
            transcendentals += padded * fan_out
        param_bytes += w_t.size * 2 + b2.size * 4

    out_dtype = jnp.bfloat16  # halves writeback; wrapper upcasts to x.dtype
    out_spec = pl.BlockSpec((num_out, tb), lambda i: (0, i))
    bytes_accessed = (padded * num_inp * x_p.dtype.itemsize
                      + padded * num_out * jnp.dtype(out_dtype).itemsize
                      + param_bytes)

    out_t = pl.pallas_call(
        _make_mlp_kernel(num_layers, _tanh_dtype()),
        out_shape=jax.ShapeDtypeStruct((num_out, padded), out_dtype),
        grid=grid,
        in_specs=in_specs,
        out_specs=out_spec,
        compiler_params=pltpu.CompilerParams(
            dimension_semantics=("parallel",)),
        cost_estimate=pl.CostEstimate(
            flops=flops,
            transcendentals=transcendentals,
            bytes_accessed=bytes_accessed),
    )(*args)

    if transposed_output:
        # Lane-dense (num_out, batch) for consumers that accept it (no extra
        # HBM transpose pass).
        return out_t[:, :batch].astype(x.dtype)
    return out_t[:, :batch].T.astype(x.dtype)


# ----------------------------------------------------------------------------
# Parameter construction (mirrors MLPNet.__init__ + init_modules) & reference.
# ----------------------------------------------------------------------------
def xavier_uniform(key, fan_in: int, fan_out: int) -> jax.Array:
    """nn.init.xavier_uniform_ equivalent; returns W of shape (in, out)."""
    bound = (6.0 / (fan_in + fan_out)) ** 0.5
    return jax.random.uniform(key, (fan_in, fan_out), jnp.float32,
                              minval=-bound, maxval=bound)


def build_mlpnet_params(key, num_inp: int, num_out: int,
                        hiddens: List[int]) -> List[Tuple[jax.Array, jax.Array]]:
    sizes = [num_inp] + list(hiddens)
    params = []
    for inp_size, out_size in zip(sizes[:-1], sizes[1:]):
        key, sub = jax.random.split(key)
        w = xavier_uniform(sub, inp_size, out_size)
        b = jnp.full((out_size,), 0.01, jnp.float32)  # m.bias.data.fill_(0.01)
        params.append((w, b))
    head_in = hiddens[-1] if hiddens else num_inp
    key, sub = jax.random.split(key)
    params.append((xavier_uniform(sub, head_in, num_out),
                   jnp.full((num_out,), 0.01, jnp.float32)))
    return params


def mlp_reference_bf16(x: jax.Array,
                       params: List[Tuple[jax.Array, jax.Array]]) -> jax.Array:
    """Pure-JAX reference with the same bf16 input/weight quantization."""
    h = x.astype(jnp.bfloat16)
    for i, (w, b) in enumerate(params):
        y = jnp.dot(h, w.astype(jnp.bfloat16),
                    preferred_element_type=jnp.float32) + b
        if i < len(params) - 1:
            h = jnp.tanh(y).astype(jnp.bfloat16)
        else:
            h = y
    return h


def mlp_reference_f32(x: jax.Array,
                      params: List[Tuple[jax.Array, jax.Array]]) -> jax.Array:
    h = x
    for i, (w, b) in enumerate(params):
        h = h @ w + b
        if i < len(params) - 1:
            h = jnp.tanh(h)
    return h


if __name__ == "__main__":
    num_inp, num_out = 16, 8
    hiddens = [32, 32]
    dropout_pct = 0.0  # no Dropout modules inserted (make_fc_layers)

    key = jax.random.PRNGKey(0)
    key, xkey, xkey2 = jax.random.split(key, 3)
    params = build_mlpnet_params(key, num_inp, num_out, hiddens)

    # Small deployment-sized batch (single 128-row tile, single grid step).
    x_small = jax.random.normal(xkey, (8, num_inp), jnp.float32)
    logits = jax.block_until_ready(mlp_forward(x_small, params))
    assert logits.shape == (8, num_out)
    ref_q = mlp_reference_bf16(x_small, params)
    ref_f = mlp_reference_f32(x_small, params)
    # Logits are bf16-precision (bf16 x/weights + bf16 writeback).
    assert jnp.allclose(logits, ref_q, atol=3e-2, rtol=3e-2), \
        "mismatch vs bf16-quantized reference"
    assert jnp.allclose(logits, ref_f, atol=6e-2, rtol=6e-2), \
        "mismatch vs f32 reference"

    # Larger ragged batch with a small tile to exercise batch padding and a
    # multi-step grid (weights stay VMEM-resident across grid steps).
    x_big = jax.random.normal(xkey2, (300, num_inp), jnp.float32)
    logits_big = jax.block_until_ready(
        mlp_forward(x_big, params, block_batch=256))
    assert logits_big.shape == (300, num_out)
    assert jnp.allclose(logits_big, mlp_reference_bf16(x_big, params),
                        atol=3e-2, rtol=3e-2), "mismatch on tiled batch"

    # Default (large-tile) path on the same data, plus the lane-dense output
    # variant for consumers that accept (num_out, batch).
    logits_def = jax.block_until_ready(mlp_forward(x_big, params))
    assert jnp.allclose(logits_def, logits_big, atol=3e-2, rtol=3e-2)
    logits_t = jax.block_until_ready(
        mlp_forward(x_big, params, transposed_output=True))
    assert logits_t.shape == (num_out, 300)
    assert jnp.allclose(logits_t.T, logits_big, atol=3e-2, rtol=3e-2)

    print("KERNEL_OK")
</pallas_src>

<mosaic_0001>
module attributes {stable_mosaic.version = 11 : i64} {
  func.func @kernel(%arg0: i32, %arg1: memref<128x16xf32, #tpu.memory_space<vmem>>, %arg2: memref<32x16xbf16, #tpu.memory_space<vmem>>, %arg3: memref<32x1xf32, #tpu.memory_space<vmem>>, %arg4: memref<32x32xbf16, #tpu.memory_space<vmem>>, %arg5: memref<32x1xf32, #tpu.memory_space<vmem>>, %arg6: memref<8x32xbf16, #tpu.memory_space<vmem>>, %arg7: memref<8x1xf32, #tpu.memory_space<vmem>>, %arg8: memref<8x128xbf16, #tpu.memory_space<vmem>>) attributes {dimension_semantics = [#tpu.dimension_semantics<parallel>], iteration_bounds = array<i64: 1>, scalar_prefetch = 0 : i64, scratch_operands = 0 : i64, tpu.core_type = #tpu.core_type<tc>, window_params = [{transform_indices = @transform_0, window_bounds = array<i64: 128, 16>}, {pipeline_mode = #tpu.pipeline_mode<synchronous>, transform_indices = @transform_1, window_bounds = array<i64: 32, 16>}, {pipeline_mode = #tpu.pipeline_mode<synchronous>, transform_indices = @transform_2, window_bounds = array<i64: 32, 1>}, {pipeline_mode = #tpu.pipeline_mode<synchronous>, transform_indices = @transform_3, window_bounds = array<i64: 32, 32>}, {pipeline_mode = #tpu.pipeline_mode<synchronous>, transform_indices = @transform_4, window_bounds = array<i64: 32, 1>}, {pipeline_mode = #tpu.pipeline_mode<synchronous>, transform_indices = @transform_5, window_bounds = array<i64: 8, 32>}, {pipeline_mode = #tpu.pipeline_mode<synchronous>, transform_indices = @transform_6, window_bounds = array<i64: 8, 1>}, {transform_indices = @transform_7, window_bounds = array<i64: 8, 128>}]} {
    %c0 = arith.constant 0 : index
    %c0_0 = arith.constant 0 : index
    %0 = vector.load %arg2[%c0, %c0_0] : memref<32x16xbf16, #tpu.memory_space<vmem>>, vector<32x16xbf16>
    %c0_1 = arith.constant 0 : index
    %c0_2 = arith.constant 0 : index
    %1 = vector.load %arg3[%c0_1, %c0_2] : memref<32x1xf32, #tpu.memory_space<vmem>>, vector<32x1xf32>
    %c0_3 = arith.constant 0 : index
    %c0_4 = arith.constant 0 : index
    %2 = vector.load %arg1[%c0_3, %c0_4] : memref<128x16xf32, #tpu.memory_space<vmem>>, vector<128x16xf32>
    %3 = arith.truncf %2 : vector<128x16xf32> to vector<128x16xbf16>
    %cst = arith.constant dense<0.000000e+00> : vector<32x128xf32>
    %4 = tpu.matmul %0, %3, %cst {dimension_numbers = #tpu.dot_dimension_numbers<[1], [1], [0], [0], [0, 0, 1, 0], [], []>} : vector<32x16xbf16>, vector<128x16xbf16>, vector<32x128xf32> -> vector<32x128xf32>
    %5 = vector.broadcast %1 : vector<32x1xf32> to vector<32x128xf32>
    %6 = arith.addf %4, %5 : vector<32x128xf32>
    %7 = arith.truncf %6 : vector<32x128xf32> to vector<32x128xbf16>
    %8 = math.tanh %7 : vector<32x128xbf16>
    %c0_5 = arith.constant 0 : index
    %c0_6 = arith.constant 0 : index
    %9 = vector.load %arg4[%c0_5, %c0_6] : memref<32x32xbf16, #tpu.memory_space<vmem>>, vector<32x32xbf16>
    %c0_7 = arith.constant 0 : index
    %c0_8 = arith.constant 0 : index
    %10 = vector.load %arg5[%c0_7, %c0_8] : memref<32x1xf32, #tpu.memory_space<vmem>>, vector<32x1xf32>
    %cst_9 = arith.constant dense<0.000000e+00> : vector<32x128xf32>
    %11 = tpu.matmul %9, %8, %cst_9 {dimension_numbers = #tpu.dot_dimension_numbers<[1], [0], [0], [1], [0, 0, 1, 1], [], []>} : vector<32x32xbf16>, vector<32x128xbf16>, vector<32x128xf32> -> vector<32x128xf32>
    %12 = vector.broadcast %10 : vector<32x1xf32> to vector<32x128xf32>
    %13 = arith.addf %11, %12 : vector<32x128xf32>
    %14 = arith.truncf %13 : vector<32x128xf32> to vector<32x128xbf16>
    %15 = math.tanh %14 : vector<32x128xbf16>
    %c0_10 = arith.constant 0 : index
    %c0_11 = arith.constant 0 : index
    %16 = vector.load %arg6[%c0_10, %c0_11] : memref<8x32xbf16, #tpu.memory_space<vmem>>, vector<8x32xbf16>
    %c0_12 = arith.constant 0 : index
    %c0_13 = arith.constant 0 : index
    %17 = vector.load %arg7[%c0_12, %c0_13] : memref<8x1xf32, #tpu.memory_space<vmem>>, vector<8x1xf32>
    %cst_14 = arith.constant dense<0.000000e+00> : vector<8x128xf32>
    %18 = tpu.matmul %16, %15, %cst_14 {dimension_numbers = #tpu.dot_dimension_numbers<[1], [0], [0], [1], [0, 0, 1, 1], [], []>} : vector<8x32xbf16>, vector<32x128xbf16>, vector<8x128xf32> -> vector<8x128xf32>
    %19 = vector.broadcast %17 : vector<8x1xf32> to vector<8x128xf32>
    %20 = arith.addf %18, %19 : vector<8x128xf32>
    %21 = arith.truncf %20 : vector<8x128xf32> to vector<8x128xbf16>
    %c0_15 = arith.constant 0 : index
    %c0_16 = arith.constant 0 : index
    %22 = vector.load %arg8[%c0_15, %c0_16] : memref<8x128xbf16, #tpu.memory_space<vmem>>, vector<8x128xbf16>
    tpu.vector_store %arg8[%c0_15, %c0_16], %21 {strides = array<i32>} : memref<8x128xbf16, #tpu.memory_space<vmem>>, vector<8x128xbf16>,
    return
  }
  func.func @transform_0(%arg0: i32) -> (i32, i32) {
    %c0_i32 = arith.constant 0 : i32
    %c0_i32_0 = arith.constant 0 : i32
    return %arg0, %c0_i32 : i32, i32
  }
  func.func @transform_1(%arg0: i32) -> (i32, i32) {
    %c0_i32 = arith.constant 0 : i32
    %c0_i32_0 = arith.constant 0 : i32
    %c0_i32_1 = arith.constant 0 : i32
    return %c0_i32, %c0_i32_0 : i32, i32
  }
  func.func @transform_2(%arg0: i32) -> (i32, i32) {
    %c0_i32 = arith.constant 0 : i32
    %c0_i32_0 = arith.constant 0 : i32
    %c0_i32_1 = arith.constant 0 : i32
    return %c0_i32, %c0_i32_0 : i32, i32
  }
  func.func @transform_3(%arg0: i32) -> (i32, i32) {
    %c0_i32 = arith.constant 0 : i32
    %c0_i32_0 = arith.constant 0 : i32
    %c0_i32_1 = arith.constant 0 : i32
    return %c0_i32, %c0_i32_0 : i32, i32
  }
  func.func @transform_4(%arg0: i32) -> (i32, i32) {
    %c0_i32 = arith.constant 0 : i32
    %c0_i32_0 = arith.constant 0 : i32
    %c0_i32_1 = arith.constant 0 : i32
    return %c0_i32, %c0_i32_0 : i32, i32
  }
  func.func @transform_5(%arg0: i32) -> (i32, i32) {
    %c0_i32 = arith.constant 0 : i32
    %c0_i32_0 = arith.constant 0 : i32
    %c0_i32_1 = arith.constant 0 : i32
    return %c0_i32, %c0_i32_0 : i32, i32
  }
  func.func @transform_6(%arg0: i32) -> (i32, i32) {
    %c0_i32 = arith.constant 0 : i32
    %c0_i32_0 = arith.constant 0 : i32
    %c0_i32_1 = arith.constant 0 : i32
    return %c0_i32, %c0_i32_0 : i32, i32
  }
  func.func @transform_7(%arg0: i32) -> (i32, i32) {
    %c0_i32 = arith.constant 0 : i32
    %c0_i32_0 = arith.constant 0 : i32
    return %c0_i32, %arg0 : i32, i32
  }
}

</mosaic_0001>

<llo_original>
// kernel: tpu_custom_call.1
$region0: #{tpu_custom_call.1}
  #allocation0 [shape = 'u32[]', space=smem, size = 0x4, offset = 0x4, fixed_abs, tag = 'smem constant byte address 0x4 - core index']
  #allocation1 [shape = 'u32[144,128]{1,0:T(1,128)}', space=vmem, size = 0x12000, scoped, tag = 'internal scratch']
  %s0 = inlined_call_operand.vmem [shape: f32[128,16], index: 0, kind: input, shape index: {}]
  %s1 = inlined_call_operand.vmem [shape: bf16[32,16], index: 1, kind: input, shape index: {}]
  %s2 = inlined_call_operand.vmem [shape: f32[32,1], index: 2, kind: input, shape index: {}]
  %s3 = inlined_call_operand.vmem [shape: bf16[32,32], index: 3, kind: input, shape index: {}]
  %s4 = inlined_call_operand.vmem [shape: f32[32,1], index: 4, kind: input, shape index: {}]
  %s5 = inlined_call_operand.vmem [shape: bf16[8,32], index: 5, kind: input, shape index: {}]
  %s6 = inlined_call_operand.vmem [shape: f32[8,1], index: 6, kind: input, shape index: {}]
  %s7 = inlined_call_operand.hbm [shape: bf16[8,128], index: 7, kind: output, shape index: {}]
  %s8 = sld [smem:[#allocation0]]
  $region38: #{tpu_custom_call.1} parent=0
    _
  %s10 = ssub.s32 1, %s8
  %s11 = scalar_select 0, %s10, %s8
  $region1: #{tpu_custom_call.1} parent=0
    #allocation2 [shape = 'u8[2048]{0}', space=vmem, size = 0x800, scoped, tag = 'output window, operand 0, single buffered']
    #allocation3 [shape = 's32[1]{0}', space=sflag, size = 0x4, scoped, tag = 'scoped memory for tpu_custom_call.1']
    %12 = vsyncpa [#allocation3], 0
    // Predicated region
    $region2: #{tpu_custom_call.1} parent=1 // pred_check
      _
    $region3: #{tpu_custom_call.1} parent=1 // pred_check_branch
      %14 = sbr.rel (0) target = $region5
    $region4: #{tpu_custom_call.1} parent=1 // pred_region
      _
    $region5: #{tpu_custom_call.1} parent=1 // pred_fallthru
      _
    // Predicated region
    $region6: #{tpu_custom_call.1} parent=1 // pred_check
      _
    $region7: #{tpu_custom_call.1} parent=1 // pred_check_branch
      %16 = sbr.rel (0) target = $region9
    $region8: #{tpu_custom_call.1} parent=1 // pred_region
      _
    $region9: #{tpu_custom_call.1} parent=1 // pred_fallthru
      _
    // Predicated region
    $region10: #{tpu_custom_call.1} parent=1 // pred_check
      _
    $region11: #{tpu_custom_call.1} parent=1 // pred_check_branch
      %18 = sbr.rel (0) target = $region13
    $region12: #{tpu_custom_call.1} parent=1 // pred_region
      _
    $region13: #{tpu_custom_call.1} parent=1 // pred_fallthru
      _
    // Predicated region
    $region14: #{tpu_custom_call.1} parent=1 // pred_check
      _
    $region15: #{tpu_custom_call.1} parent=1 // pred_check_branch
      %20 = sbr.rel (0) target = $region17
    $region16: #{tpu_custom_call.1} parent=1 // pred_region
      _
    $region17: #{tpu_custom_call.1} parent=1 // pred_fallthru
      _
    // Predicated region
    $region18: #{tpu_custom_call.1} parent=1 // pred_check
      _
    $region19: #{tpu_custom_call.1} parent=1 // pred_check_branch
      %22 = sbr.rel (0) target = $region21
    $region20: #{tpu_custom_call.1} parent=1 // pred_region
      _
    $region21: #{tpu_custom_call.1} parent=1 // pred_fallthru
      _
    // Predicated region
    $region22: #{tpu_custom_call.1} parent=1 // pred_check
      _
    $region23: #{tpu_custom_call.1} parent=1 // pred_check_branch
      %24 = sbr.rel (0) target = $region25
    $region24: #{tpu_custom_call.1} parent=1 // pred_region
      _
    $region25: #{tpu_custom_call.1} parent=1 // pred_fallthru
      _
    // Predicated region
    $region26: #{tpu_custom_call.1} parent=1 // pred_check
      _
    $region27: #{tpu_custom_call.1} parent=1 // pred_check_branch
      %26 = sbr.rel (0) target = $region29
    $region28: #{tpu_custom_call.1} parent=1 // pred_region
      _
    $region29: #{tpu_custom_call.1} parent=1 // pred_fallthru
      _
    %v28 = vld [vmem:[%s1] sm:$0xf]
    %v29 = vld [vmem:[%s1 + $0x4] sm:$0xf]
    %v30 = vld [vmem:[%s1 + $0x8] sm:$0xf]
    %v31 = vld [vmem:[%s1 + $0xc] sm:$0xf]
    %v32 = vld [vmem:[%s2] sm:$0xff]
    %v33 = vld [vmem:[%s2 + $0x8] sm:$0xff]
    %v34 = vld [vmem:[%s2 + $0x10] sm:$0xff]
    %v35 = vld [vmem:[%s2 + $0x18] sm:$0xff]
    %v36 = vld [vmem:[%s0] sm:$0xff]
    %v37 = vld [vmem:[%s0 + $0x8] sm:$0xff]
    %v38 = vld [vmem:[%s0 + $0x10] sm:$0xff]
    %v39 = vld [vmem:[%s0 + $0x18] sm:$0xff]
    %v40 = vld [vmem:[%s0 + $0x20] sm:$0xff]
    %v41 = vld [vmem:[%s0 + $0x28] sm:$0xff]
    %v42 = vld [vmem:[%s0 + $0x30] sm:$0xff]
    %v43 = vld [vmem:[%s0 + $0x38] sm:$0xff]
    %v44 = vld [vmem:[%s0 + $0x40] sm:$0xff]
    %v45 = vld [vmem:[%s0 + $0x48] sm:$0xff]
    %v46 = vld [vmem:[%s0 + $0x50] sm:$0xff]
    %v47 = vld [vmem:[%s0 + $0x58] sm:$0xff]
    %v48 = vld [vmem:[%s0 + $0x60] sm:$0xff]
    %v49 = vld [vmem:[%s0 + $0x68] sm:$0xff]
    %v50 = vld [vmem:[%s0 + $0x70] sm:$0xff]
    %v51 = vld [vmem:[%s0 + $0x78] sm:$0xff]
    %v52 = vpack.c.bf16 %v37, %v36
    %v53 = vpack.c.bf16 %v39, %v38
    %v54 = vpack.c.bf16 %v41, %v40
    %v55 = vpack.c.bf16 %v43, %v42
    %v56 = vpack.c.bf16 %v45, %v44
    %v57 = vpack.c.bf16 %v47, %v46
    %v58 = vpack.c.bf16 %v49, %v48
    %v59 = vpack.c.bf16 %v51, %v50
    %61 = vset.pattern.permute.xlu0 0
    %62 = vperm.xlu0 %61, %v32
    %v63 = vpop.permute.xlu0 %62
    %66 = vset.pattern.permute.xlu0 0
    %67 = vperm.xlu0 %66, %v33
    %v68 = vpop.permute.xlu0 %67
    %71 = vset.pattern.permute.xlu0 0
    %72 = vperm.xlu0 %71, %v34
    %v73 = vpop.permute.xlu0 %72
    %76 = vset.pattern.permute.xlu0 0
    %77 = vperm.xlu0 %76, %v35
    %v78 = vpop.permute.xlu0 %77
    %v84 = vunpack.c.l.b16 %v28
    %v85 = vunpack.c.l.b16 %v29
    %v86 = vunpack.c.l.b16 %v30
    %v87 = vunpack.c.l.b16 %v31
    %v88 = vpack.c.b16 %v85, %v84
    %v89 = vpack.c.b16 %v87, %v86
    %vm90 = vcmask 130048
    %v92 = vsel %vm90, %v88, 0
    %v95 = vsel %vm90, %v89, 0
    %v98 = vsel %vm90, %v52, 0
    %v101 = vsel %vm90, %v53, 0
    %v104 = vsel %vm90, %v54, 0
    %v107 = vsel %vm90, %v55, 0
    %v110 = vsel %vm90, %v56, 0
    %v113 = vsel %vm90, %v57, 0
    %v116 = vsel %vm90, %v58, 0
    %v119 = vsel %vm90, %v59, 0
    %121 = vmatprep.subr.bf16.mxu0 0
    %122 = vmatpush1.bf16.xpose.msra.mxu0 %v98
    %123 = vmatprep.subr.bf16.mxu0 0
    %124 = vmatpush1.bf16.xpose.msra.mxu0 %v101
    %125 = vmatprep.subr.bf16.mxu0 0
    %126 = vmatpush1.bf16.xpose.msra.mxu0 %v104
    %127 = vmatprep.subr.bf16.mxu0 0
    %128 = vmatpush1.bf16.xpose.msra.mxu0 %v107
    %129 = vmatprep.subr.bf16.mxu0 0
    %130 = vmatpush1.bf16.xpose.msra.mxu0 %v110
    %131 = vmatprep.subr.bf16.mxu0 0
    %132 = vmatpush1.bf16.xpose.msra.mxu0 %v113
    %133 = vmatprep.subr.bf16.mxu0 0
    %134 = vmatpush1.bf16.xpose.msra.mxu0 %v116
    %135 = vmatprep.subr.bf16.mxu0 0
    %136 = vmatpush1.bf16.xpose.msra.mxu0 %v119
    %137 = vmatprep.subr.bf16.mxu0 0
    %138 = vmatpush1.bf16.xpose.msra.mxu0 0
    %139 = vmatprep.subr.bf16.mxu0 0
    %140 = vmatpush1.bf16.xpose.msra.mxu0 0
    %141 = vmatprep.subr.bf16.mxu0 0
    %142 = vmatpush1.bf16.xpose.msra.mxu0 0
    %143 = vmatprep.subr.bf16.mxu0 0
    %144 = vmatpush1.bf16.xpose.msra.mxu0 0
    %145 = vmatprep.subr.bf16.mxu0 0
    %146 = vmatpush1.bf16.xpose.msra.mxu0 0
    %147 = vmatprep.subr.bf16.mxu0 0
    %148 = vmatpush1.bf16.xpose.msra.mxu0 0
    %149 = vmatprep.subr.bf16.mxu0 0
    %150 = vmatpush1.bf16.xpose.msra.mxu0 0
    %151 = vmatprep.subr.bf16.mxu0 0
    %152 = vmatpush1.bf16.xpose.msra.mxu0 0
    %153 = vmatprep.mubr.bf16.mxu0 0
    %154 = vmatmul.mubr.bf16.gmra.mrb[0].mxu0 %v92
    %v155 = vpop.f32.mrb[0].mxu0
    %v156 = vadd.f32 %v63, %v155
    %v157 = vpop.f32.mrb[0].mxu0
    %v158 = vpop.f32.mrb[0].mxu0
    %v159 = vadd.f32 %v68, %v158
    %v160 = vpop.f32.mrb[0].mxu0
    %161 = vmatprep.mubr.bf16.mxu0 0
    %162 = vmatmul.mubr.bf16.gmra.mrb[0].mxu0 %v95
    %v163 = vpop.f32.mrb[0].mxu0
    %v164 = vadd.f32 %v73, %v163
    %v165 = vpop.f32.mrb[0].mxu0
    %v166 = vpop.f32.mrb[0].mxu0
    %v167 = vadd.f32 %v78, %v166
    %v168 = vpop.f32.mrb[0].mxu0
    %169 = vdwg.mxu0
    %v170 = vpack.c.bf16 %v159, %v156
    %v171 = vpack.c.bf16 %v167, %v164
    %v172 = vtanh.bf16.pop %v170
    %v173 = vtanh.bf16.pop %v171
    %v174 = vld [vmem:[%s3] sm:$0xf]
    %v175 = vld [vmem:[%s3 + $0x4] sm:$0xf]
    %v176 = vld [vmem:[%s3 + $0x8] sm:$0xf]
    %v177 = vld [vmem:[%s3 + $0xc] sm:$0xf]
    %v178 = vld [vmem:[%s4] sm:$0xff]
    %v179 = vld [vmem:[%s4 + $0x8] sm:$0xff]
    %v180 = vld [vmem:[%s4 + $0x10] sm:$0xff]
    %v181 = vld [vmem:[%s4 + $0x18] sm:$0xff]
    %183 = vset.pattern.permute.xlu0 0
    %184 = vperm.xlu0 %183, %v178
    %v185 = vpop.permute.xlu0 %184
    %188 = vset.pattern.permute.xlu0 0
    %189 = vperm.xlu0 %188, %v179
    %v190 = vpop.permute.xlu0 %189
    %193 = vset.pattern.permute.xlu0 0
    %194 = vperm.xlu0 %193, %v180
    %v195 = vpop.permute.xlu0 %194
    %198 = vset.pattern.permute.xlu0 0
    %199 = vperm.xlu0 %198, %v181
    %v200 = vpop.permute.xlu0 %199
    %v206 = vunpack.c.l.b16 %v174
    %v207 = vunpack.c.l.b16 %v175
    %v208 = vunpack.c.l.b16 %v176
    %v209 = vunpack.c.l.b16 %v177
    %v210 = vpack.c.b16 %v207, %v206
    %v211 = vpack.c.b16 %v209, %v208
    %vm212 = vcmask 261120
    %v214 = vsel %vm212, %v210, 0
    %v217 = vsel %vm212, %v211, 0
    %219 = vmatprep.subr.bf16.mxu0 0
    %220 = vmatpush1.bf16.msra.mxu0 %v172
    %221 = vmatprep.subr.bf16.mxu0 0
    %222 = vmatpush1.bf16.msra.mxu0 %v173
    %223 = vmatprep.subr.bf16.mxu0 0
    %224 = vmatpush1.bf16.msra.mxu0 0
    %225 = vmatprep.subr.bf16.mxu0 0
    %226 = vmatpush1.bf16.msra.mxu0 0
    %227 = vmatprep.subr.bf16.mxu0 0
    %228 = vmatpush1.bf16.msra.mxu0 0
    %229 = vmatprep.subr.bf16.mxu0 0
    %230 = vmatpush1.bf16.msra.mxu0 0
    %231 = vmatprep.subr.bf16.mxu0 0
    %232 = vmatpush1.bf16.msra.mxu0 0
    %233 = vmatprep.subr.bf16.mxu0 0
    %234 = vmatpush1.bf16.msra.mxu0 0
    %235 = vmatprep.subr.bf16.mxu0 0
    %236 = vmatpush1.bf16.msra.mxu0 0
    %237 = vmatprep.subr.bf16.mxu0 0
    %238 = vmatpush1.bf16.msra.mxu0 0
    %239 = vmatprep.subr.bf16.mxu0 0
    %240 = vmatpush1.bf16.msra.mxu0 0
    %241 = vmatprep.subr.bf16.mxu0 0
    %242 = vmatpush1.bf16.msra.mxu0 0
    %243 = vmatprep.subr.bf16.mxu0 0
    %244 = vmatpush1.bf16.msra.mxu0 0
    %245 = vmatprep.subr.bf16.mxu0 0
    %246 = vmatpush1.bf16.msra.mxu0 0
    %247 = vmatprep.subr.bf16.mxu0 0
    %248 = vmatpush1.bf16.msra.mxu0 0
    %249 = vmatprep.subr.bf16.mxu0 0
    %250 = vmatpush1.bf16.msra.mxu0 0
    %251 = vmatprep.mubr.bf16.mxu0 0
    %252 = vmatmul.mubr.bf16.gmra.mrb[0].mxu0 %v214
    %v253 = vpop.f32.mrb[0].mxu0
    %v254 = vadd.f32 %v185, %v253
    %v255 = vpop.f32.mrb[0].mxu0
    %v256 = vpop.f32.mrb[0].mxu0
    %v257 = vadd.f32 %v190, %v256
    %v258 = vpop.f32.mrb[0].mxu0
    %259 = vmatprep.mubr.bf16.mxu0 0
    %260 = vmatmul.mubr.bf16.gmra.mrb[0].mxu0 %v217
    %v261 = vpop.f32.mrb[0].mxu0
    %v262 = vadd.f32 %v195, %v261
    %v263 = vpop.f32.mrb[0].mxu0
    %v264 = vpop.f32.mrb[0].mxu0
    %v265 = vadd.f32 %v200, %v264
    %v266 = vpop.f32.mrb[0].mxu0
    %267 = vdwg.mxu0
    %v268 = vpack.c.bf16 %v257, %v254
    %v269 = vpack.c.bf16 %v265, %v262
    %v270 = vtanh.bf16.pop %v268
    %v271 = vtanh.bf16.pop %v269
    %v272 = vld [vmem:[%s5] sm:$0xf]
    %v273 = vld [vmem:[%s6] sm:$0xff]
    %275 = vset.pattern.permute.xlu0 0
    %276 = vperm.xlu0 %275, %v273
    %v277 = vpop.permute.xlu0 %276
    %v280 = vsel %vm212, %v272, 0
    %282 = vmatprep.subr.bf16.mxu0 0
    %283 = vmatpush1.bf16.msra.mxu0 %v270
    %284 = vmatprep.subr.bf16.mxu0 0
    %285 = vmatpush1.bf16.msra.mxu0 %v271
    %286 = vmatprep.subr.bf16.mxu0 0
    %287 = vmatpush1.bf16.msra.mxu0 0
    %288 = vmatprep.subr.bf16.mxu0 0
    %289 = vmatpush1.bf16.msra.mxu0 0
    %290 = vmatprep.subr.bf16.mxu0 0
    %291 = vmatpush1.bf16.msra.mxu0 0
    %292 = vmatprep.subr.bf16.mxu0 0
    %293 = vmatpush1.bf16.msra.mxu0 0
    %294 = vmatprep.subr.bf16.mxu0 0
    %295 = vmatpush1.bf16.msra.mxu0 0
    %296 = vmatprep.subr.bf16.mxu0 0
    %297 = vmatpush1.bf16.msra.mxu0 0
    %298 = vmatprep.subr.bf16.mxu0 0
    %299 = vmatpush1.bf16.msra.mxu0 0
    %300 = vmatprep.subr.bf16.mxu0 0
    %301 = vmatpush1.bf16.msra.mxu0 0
    %302 = vmatprep.subr.bf16.mxu0 0
    %303 = vmatpush1.bf16.msra.mxu0 0
    %304 = vmatprep.subr.bf16.mxu0 0
    %305 = vmatpush1.bf16.msra.mxu0 0
    %306 = vmatprep.subr.bf16.mxu0 0
    %307 = vmatpush1.bf16.msra.mxu0 0
    %308 = vmatprep.subr.bf16.mxu0 0
    %309 = vmatpush1.bf16.msra.mxu0 0
    %310 = vmatprep.subr.bf16.mxu0 0
    %311 = vmatpush1.bf16.msra.mxu0 0
    %312 = vmatprep.subr.bf16.mxu0 0
    %313 = vmatpush1.bf16.msra.mxu0 0
    %314 = vmatprep.mubr.bf16.mxu0 0
    %315 = vmatmul.mubr.bf16.gmra.mrb[0].mxu0 %v280
    %v316 = vpop.f32.mrb[0].mxu0
    %v317 = vadd.f32 %v277, %v316
    %v318 = vpop.f32.mrb[0].mxu0
    %v319 = vpop.f32.mrb[0].mxu0
    %v320 = vpop.f32.mrb[0].mxu0
    %321 = vdwg.mxu0
    %v322 = vpack.c.bf16 %v317, %v317
    %323 = vst [vmem:[#allocation2] sm:$0xf] %v322
    // Predicated region
    $region30: #{tpu_custom_call.1} parent=1 // pred_check
      _
    $region31: #{tpu_custom_call.1} parent=1 // pred_check_branch
      %325 = sbr.rel (0) target = $region33
    $region32: #{tpu_custom_call.1} parent=1 // pred_region
      %s327 = ssub.s32 64, 64
      %328 = vsyncadd [#allocation3], %s327
      %s330 = sshll.u32 [#allocation2], 4
      %s331 = int_to_ptr.vmem [resolvable:$true] %s330
      %333 = dma.vmem_to_hbm [thread:$0]  %s331, 64, %s7, [#allocation3]
    $region33: #{tpu_custom_call.1} parent=1 // pred_fallthru
      _
    // Predicated region
    $region34: #{tpu_custom_call.1} parent=1 // pred_check
      _
    $region35: #{tpu_custom_call.1} parent=1 // pred_check_branch
      %335 = sbr.rel (0) target = $region37
    $region36: #{tpu_custom_call.1} parent=1 // pred_region
      %336 = dma.done [#allocation3], 64
    $region37: #{tpu_custom_call.1} parent=1 // pred_fallthru
      _
    %337 = vsyncpa [#allocation3], 1

</llo_original>
